<compile_context>
chip_gen: v7x
topology: tpu7x:2x2x1
jax: 0.10.0
libtpu: 0.0.40
codegen_flags: <defaults>
</compile_context>

<pallas_src>
import functools

import jax
import jax.numpy as jnp
from jax.experimental import pallas as pl
from jax.experimental.pallas import tpu as pltpu

EPS = 1e-5
LANE = 128
SUBLANE = 8


# ----------------------------------------------------------------------------
# Kernel
# ----------------------------------------------------------------------------
def dqn_kernel(x_ref, ws_ref, gb_ref, o_ref, *, inv_n, n_valid, need_mask):
    """Fused (Linear -> BatchNorm1d) x3.

    x_ref : (B_pad, D) f32   -- lane-padded activations
    ws_ref: (3, D, D)  bf16  -- stacked, zero-padded weight matrices
    gb_ref: (2, 3*D)   f32   -- [gamma; beta] for the three BN layers
    o_ref : (B_pad, D) f32
    """
    D = ws_ref.shape[2]

    if need_mask:
        # Zero-out padded batch rows when accumulating BN statistics so the
        # stats are exactly those of the true batch.
        row = jax.lax.broadcasted_iota(jnp.int32, (x_ref.shape[0], 1), 0)
        mask = (row < n_valid).astype(jnp.float32)
    else:
        mask = None

    def bn(y, gamma, beta):
        # Training-mode BatchNorm1d, mean-centered (two-pass) variance in f32,
        # folded into a single scale/shift applied to y.
        ys = y if mask is None else y * mask
        mean = jnp.sum(ys, axis=0, keepdims=True) * inv_n
        yc = y - mean
        yc2 = yc * yc
        if mask is not None:
            yc2 = yc2 * mask
        var = jnp.sum(yc2, axis=0, keepdims=True) * inv_n
        scale = gamma * jax.lax.rsqrt(var + EPS)
        shift = beta - mean * scale
        return y * scale + shift

    y = x_ref[...]
    for layer in range(3):
        w = ws_ref[layer]                                   # (D, D) bf16
        gb = gb_ref[:, layer * D:(layer + 1) * D]           # (2, D) f32
        # bf16 LHS x bf16 RHS -> single-pass MXU, f32 accumulate.
        z = jnp.dot(y.astype(jnp.bfloat16), w,
                    preferred_element_type=jnp.float32)
        y = bn(z, gb[0:1, :], gb[1:2, :])

    o_ref[...] = y.astype(o_ref.dtype)


# ----------------------------------------------------------------------------
# Parameter packing (one-time, outside the per-step call)
# ----------------------------------------------------------------------------
def _round_up(n, m):
    return ((n + m - 1) // m) * m


def pad_params(params):
    """Stack/pad weights to one (3, D, D) bf16 buffer and gamma/beta to (2, 3*D).

    All feature dims are zero-padded to a common lane-multiple D.  Padded
    columns produce exactly-zero activations through every layer (zero weight
    columns -> y=0 -> mean=0, var=0 -> scale finite, shift=beta_pad=0 -> 0), so
    the padded network equals the original on the first `action_size` outputs.
    Linear biases are intentionally dropped: training-mode BN cancels them.
    """
    state = params["w1"].shape[0]
    hidden = params["w1"].shape[1]
    action = params["w3"].shape[1]
    # TODO(synk): on v6e/v7x pad to 256 if hidden ever grows (2x256x256 MXU);
    #             128 is enough at hidden=64 where the call is latency-bound.
    D = _round_up(max(state, hidden, action), LANE)

    def pad_w(w):
        return jnp.pad(w, ((0, D - w.shape[0]), (0, D - w.shape[1])))

    ws = jnp.stack([pad_w(params["w1"]),
                    pad_w(params["w2"]),
                    pad_w(params["w3"])]).astype(jnp.bfloat16)      # (3, D, D)

    def pack_gb(g, b):
        gamma = jnp.pad(g.reshape(1, -1), ((0, 0), (0, D - g.size)),
                        constant_values=1.0)
        beta = jnp.pad(b.reshape(1, -1), ((0, 0), (0, D - b.size)))
        return jnp.concatenate([gamma, beta], axis=0)               # (2, D)

    gb = jnp.concatenate([pack_gb(params["g1"], params["be1"]),
                          pack_gb(params["g2"], params["be2"]),
                          pack_gb(params["g3"], params["be3"])], axis=1)  # (2, 3D)

    return dict(ws=ws, gb=gb, feat_pad=D, action_size=action, state_size=state)


# ----------------------------------------------------------------------------
# Wrapper
# ----------------------------------------------------------------------------
def dqn_forward(x, pp):
    """x: (B, state_size) float32. pp: output of pad_params()."""
    B = x.shape[0]
    D = pp["feat_pad"]
    B_pad = _round_up(max(B, 1), SUBLANE)

    # Pad x once: lane-dense LHS load, sublane-aligned rows.
    xp = jnp.pad(x, ((0, B_pad - B), (0, D - x.shape[1])))

    kernel = functools.partial(dqn_kernel,
                               inv_n=1.0 / B,
                               n_valid=B,
                               need_mask=(B_pad != B))

    flops = 2 * B_pad * D * D * 3
    bytes_accessed = (xp.size * 4 + pp["ws"].size * 2 + pp["gb"].size * 4
                      + B_pad * D * 4)

    vmem = pl.BlockSpec(memory_space=pltpu.MemorySpace.VMEM)
    out_p = pl.pallas_call(
        kernel,
        out_shape=jax.ShapeDtypeStruct((B_pad, D), jnp.float32),
        in_specs=[vmem, vmem, vmem],
        out_specs=vmem,
        cost_estimate=pl.CostEstimate(flops=flops,
                                      transcendentals=3 * D,
                                      bytes_accessed=bytes_accessed),
    )(xp, pp["ws"], pp["gb"])

    # TODO(synk): drop this slice (see header TODO) when the consumer is an
    #             argmax over Q-values and beta_pad of layer 3 is set to -1e9.
    return out_p[:B, :pp["action_size"]]


# ----------------------------------------------------------------------------
# Synthetic parameters + pure-JAX reference
# ----------------------------------------------------------------------------
def make_params(key, state_size, action_size, hidden_size=64):
    """Deterministic synthetic parameters (PyTorch Linear-style uniform init)."""
    ks = jax.random.split(key, 6)

    def linear_init(kw, kb, fan_in, fan_out):
        bound = 1.0 / jnp.sqrt(jnp.float32(fan_in))
        w = jax.random.uniform(kw, (fan_in, fan_out), jnp.float32, -bound, bound)
        b = jax.random.uniform(kb, (1, fan_out), jnp.float32, -bound, bound)
        return w, b

    w1, b1 = linear_init(ks[0], ks[1], state_size, hidden_size)
    w2, b2 = linear_init(ks[2], ks[3], hidden_size, hidden_size)
    w3, b3 = linear_init(ks[4], ks[5], hidden_size, action_size)

    return dict(
        w1=w1, b1=b1, g1=jnp.ones((1, hidden_size), jnp.float32),
        be1=jnp.zeros((1, hidden_size), jnp.float32),
        w2=w2, b2=b2, g2=jnp.ones((1, hidden_size), jnp.float32),
        be2=jnp.zeros((1, hidden_size), jnp.float32),
        w3=w3, b3=b3, g3=jnp.ones((1, action_size), jnp.float32),
        be3=jnp.zeros((1, action_size), jnp.float32),
    )


def dqn_reference(x, p, matmul_dtype=jnp.float32, use_bias=True):
    """Pure-JAX reference matching the PyTorch module (training-mode BN)."""
    def bn(y, g, b):
        m = jnp.mean(y, axis=0, keepdims=True)
        v = jnp.mean((y - m) ** 2, axis=0, keepdims=True)
        return (y - m) / jnp.sqrt(v + EPS) * g + b

    def lin(y, w, b):
        z = jnp.dot(y.astype(matmul_dtype), w.astype(matmul_dtype),
                    preferred_element_type=jnp.float32)
        return z + b if use_bias else z

    y = bn(lin(x, p["w1"], p["b1"]), p["g1"], p["be1"])
    y = bn(lin(y, p["w2"], p["b2"]), p["g2"], p["be2"])
    y = bn(lin(y, p["w3"], p["b3"]), p["g3"], p["be3"])
    return y


# ----------------------------------------------------------------------------
if __name__ == "__main__":
    key = jax.random.PRNGKey(0)
    k_x, k_p = jax.random.split(key)

    batch = 8          # >1 required for meaningful training-mode BatchNorm
    state_size = 16
    action_size = 8
    hidden_size = 64   # module default

    x = jax.random.normal(k_x, (batch, state_size), jnp.float32)
    params = make_params(k_p, state_size, action_size, hidden_size)
    padded = pad_params(params)            # one-time prep (bf16, stacked, packed)

    out = jax.block_until_ready(dqn_forward(x, padded))
    assert out.shape == (batch, action_size)

    # Tight check of the kernel logic against an equivalent bf16-matmul
    # reference (bias-free; bias dropping is exact under training-mode BN).
    ref_bf16 = dqn_reference(x, params, matmul_dtype=jnp.bfloat16, use_bias=False)
    assert jnp.allclose(out, ref_bf16, atol=2e-3, rtol=2e-3), \
        "mismatch vs bf16 reference"

    # Looser check against the full-f32, PyTorch-faithful reference — the only
    # difference is bf16 weight/activation quantization in the matmuls.
    ref_f32 = dqn_reference(x, params)
    assert jnp.allclose(out, ref_f32, atol=1e-1, rtol=1e-1), \
        "mismatch vs f32 reference"

    print("KERNEL_OK")
</pallas_src>

<mosaic_0001>
module attributes {stable_mosaic.version = 11 : i64} {
  func.func @dqn_kernel(%arg0: memref<8x128xf32, #tpu.memory_space<vmem>>, %arg1: memref<3x128x128xbf16, #tpu.memory_space<vmem>>, %arg2: memref<2x384xf32, #tpu.memory_space<vmem>>, %arg3: memref<8x128xf32, #tpu.memory_space<vmem>>) attributes {dimension_semantics = [], scalar_prefetch = 0 : i64, scratch_operands = 0 : i64, tpu.core_type = #tpu.core_type<tc>} {
    %c0 = arith.constant 0 : index
    %c0_0 = arith.constant 0 : index
    %0 = vector.load %arg0[%c0, %c0_0] : memref<8x128xf32, #tpu.memory_space<vmem>>, vector<8x128xf32>
    %c0_1 = arith.constant 0 : index
    %c0_2 = arith.constant 0 : index
    %c0_3 = arith.constant 0 : index
    %1 = vector.load %arg1[%c0_1, %c0_2, %c0_3] : memref<3x128x128xbf16, #tpu.memory_space<vmem>>, vector<1x128x128xbf16>
    %2 = vector.shape_cast %1 : vector<1x128x128xbf16> to vector<128x128xbf16>
    %c0_4 = arith.constant 0 : index
    %c0_5 = arith.constant 0 : index
    %3 = vector.load %arg2[%c0_4, %c0_5] : memref<2x384xf32, #tpu.memory_space<vmem>>, vector<2x128xf32>
    %4 = arith.truncf %0 : vector<8x128xf32> to vector<8x128xbf16>
    %cst = arith.constant dense<0.000000e+00> : vector<8x128xf32>
    %5 = tpu.matmul %4, %2, %cst {dimension_numbers = #tpu.dot_dimension_numbers<[1], [0], [0], [1], [0, 0, 1, 1], [], []>} : vector<8x128xbf16>, vector<128x128xbf16>, vector<8x128xf32> -> vector<8x128xf32>
    %6 = vector.extract_strided_slice %3 {offsets = [0, 0], sizes = [1, 128], strides = [1, 1]} : vector<2x128xf32> to vector<1x128xf32>
    %7 = vector.extract_strided_slice %3 {offsets = [1, 0], sizes = [1, 128], strides = [1, 1]} : vector<2x128xf32> to vector<1x128xf32>
    %cst_6 = arith.constant dense<0.000000e+00> : vector<128xf32>
    %8 = vector.multi_reduction <add>, %5, %cst_6 [0] : vector<8x128xf32> to vector<128xf32>
    %9 = vector.shape_cast %8 : vector<128xf32> to vector<1x128xf32>
    %cst_7 = arith.constant 1.250000e-01 : f32
    %10 = vector.broadcast %cst_7 : f32 to vector<1x128xf32>
    %11 = arith.mulf %9, %10 : vector<1x128xf32>
    %12 = vector.broadcast %11 : vector<1x128xf32> to vector<8x128xf32>
    %13 = arith.subf %5, %12 : vector<8x128xf32>
    %14 = arith.mulf %13, %13 : vector<8x128xf32>
    %cst_8 = arith.constant dense<0.000000e+00> : vector<128xf32>
    %15 = vector.multi_reduction <add>, %14, %cst_8 [0] : vector<8x128xf32> to vector<128xf32>
    %16 = vector.shape_cast %15 : vector<128xf32> to vector<1x128xf32>
    %cst_9 = arith.constant 1.250000e-01 : f32
    %17 = vector.broadcast %cst_9 : f32 to vector<1x128xf32>
    %18 = arith.mulf %16, %17 : vector<1x128xf32>
    %cst_10 = arith.constant 9.99999974E-6 : f32
    %19 = vector.broadcast %cst_10 : f32 to vector<1x128xf32>
    %20 = arith.addf %18, %19 : vector<1x128xf32>
    %21 = math.rsqrt %20 : vector<1x128xf32>
    %22 = arith.mulf %6, %21 : vector<1x128xf32>
    %23 = arith.mulf %11, %22 : vector<1x128xf32>
    %24 = arith.subf %7, %23 : vector<1x128xf32>
    %25 = vector.broadcast %22 : vector<1x128xf32> to vector<8x128xf32>
    %26 = arith.mulf %5, %25 : vector<8x128xf32>
    %27 = vector.broadcast %24 : vector<1x128xf32> to vector<8x128xf32>
    %28 = arith.addf %26, %27 : vector<8x128xf32>
    %c1 = arith.constant 1 : index
    %c0_11 = arith.constant 0 : index
    %c0_12 = arith.constant 0 : index
    %29 = vector.load %arg1[%c1, %c0_11, %c0_12] : memref<3x128x128xbf16, #tpu.memory_space<vmem>>, vector<1x128x128xbf16>
    %30 = vector.shape_cast %29 : vector<1x128x128xbf16> to vector<128x128xbf16>
    %c0_13 = arith.constant 0 : index
    %c128 = arith.constant 128 : index
    %31 = vector.load %arg2[%c0_13, %c128] : memref<2x384xf32, #tpu.memory_space<vmem>>, vector<2x128xf32>
    %32 = arith.truncf %28 : vector<8x128xf32> to vector<8x128xbf16>
    %cst_14 = arith.constant dense<0.000000e+00> : vector<8x128xf32>
    %33 = tpu.matmul %32, %30, %cst_14 {dimension_numbers = #tpu.dot_dimension_numbers<[1], [0], [0], [1], [0, 0, 1, 1], [], []>} : vector<8x128xbf16>, vector<128x128xbf16>, vector<8x128xf32> -> vector<8x128xf32>
    %34 = vector.extract_strided_slice %31 {offsets = [0, 0], sizes = [1, 128], strides = [1, 1]} : vector<2x128xf32> to vector<1x128xf32>
    %35 = vector.extract_strided_slice %31 {offsets = [1, 0], sizes = [1, 128], strides = [1, 1]} : vector<2x128xf32> to vector<1x128xf32>
    %cst_15 = arith.constant dense<0.000000e+00> : vector<128xf32>
    %36 = vector.multi_reduction <add>, %33, %cst_15 [0] : vector<8x128xf32> to vector<128xf32>
    %37 = vector.shape_cast %36 : vector<128xf32> to vector<1x128xf32>
    %cst_16 = arith.constant 1.250000e-01 : f32
    %38 = vector.broadcast %cst_16 : f32 to vector<1x128xf32>
    %39 = arith.mulf %37, %38 : vector<1x128xf32>
    %40 = vector.broadcast %39 : vector<1x128xf32> to vector<8x128xf32>
    %41 = arith.subf %33, %40 : vector<8x128xf32>
    %42 = arith.mulf %41, %41 : vector<8x128xf32>
    %cst_17 = arith.constant dense<0.000000e+00> : vector<128xf32>
    %43 = vector.multi_reduction <add>, %42, %cst_17 [0] : vector<8x128xf32> to vector<128xf32>
    %44 = vector.shape_cast %43 : vector<128xf32> to vector<1x128xf32>
    %cst_18 = arith.constant 1.250000e-01 : f32
    %45 = vector.broadcast %cst_18 : f32 to vector<1x128xf32>
    %46 = arith.mulf %44, %45 : vector<1x128xf32>
    %cst_19 = arith.constant 9.99999974E-6 : f32
    %47 = vector.broadcast %cst_19 : f32 to vector<1x128xf32>
    %48 = arith.addf %46, %47 : vector<1x128xf32>
    %49 = math.rsqrt %48 : vector<1x128xf32>
    %50 = arith.mulf %34, %49 : vector<1x128xf32>
    %51 = arith.mulf %39, %50 : vector<1x128xf32>
    %52 = arith.subf %35, %51 : vector<1x128xf32>
    %53 = vector.broadcast %50 : vector<1x128xf32> to vector<8x128xf32>
    %54 = arith.mulf %33, %53 : vector<8x128xf32>
    %55 = vector.broadcast %52 : vector<1x128xf32> to vector<8x128xf32>
    %56 = arith.addf %54, %55 : vector<8x128xf32>
    %c2 = arith.constant 2 : index
    %c0_20 = arith.constant 0 : index
    %c0_21 = arith.constant 0 : index
    %57 = vector.load %arg1[%c2, %c0_20, %c0_21] : memref<3x128x128xbf16, #tpu.memory_space<vmem>>, vector<1x128x128xbf16>
    %58 = vector.shape_cast %57 : vector<1x128x128xbf16> to vector<128x128xbf16>
    %c0_22 = arith.constant 0 : index
    %c256 = arith.constant 256 : index
    %59 = vector.load %arg2[%c0_22, %c256] : memref<2x384xf32, #tpu.memory_space<vmem>>, vector<2x128xf32>
    %60 = arith.truncf %56 : vector<8x128xf32> to vector<8x128xbf16>
    %cst_23 = arith.constant dense<0.000000e+00> : vector<8x128xf32>
    %61 = tpu.matmul %60, %58, %cst_23 {dimension_numbers = #tpu.dot_dimension_numbers<[1], [0], [0], [1], [0, 0, 1, 1], [], []>} : vector<8x128xbf16>, vector<128x128xbf16>, vector<8x128xf32> -> vector<8x128xf32>
    %62 = vector.extract_strided_slice %59 {offsets = [0, 0], sizes = [1, 128], strides = [1, 1]} : vector<2x128xf32> to vector<1x128xf32>
    %63 = vector.extract_strided_slice %59 {offsets = [1, 0], sizes = [1, 128], strides = [1, 1]} : vector<2x128xf32> to vector<1x128xf32>
    %cst_24 = arith.constant dense<0.000000e+00> : vector<128xf32>
    %64 = vector.multi_reduction <add>, %61, %cst_24 [0] : vector<8x128xf32> to vector<128xf32>
    %65 = vector.shape_cast %64 : vector<128xf32> to vector<1x128xf32>
    %cst_25 = arith.constant 1.250000e-01 : f32
    %66 = vector.broadcast %cst_25 : f32 to vector<1x128xf32>
    %67 = arith.mulf %65, %66 : vector<1x128xf32>
    %68 = vector.broadcast %67 : vector<1x128xf32> to vector<8x128xf32>
    %69 = arith.subf %61, %68 : vector<8x128xf32>
    %70 = arith.mulf %69, %69 : vector<8x128xf32>
    %cst_26 = arith.constant dense<0.000000e+00> : vector<128xf32>
    %71 = vector.multi_reduction <add>, %70, %cst_26 [0] : vector<8x128xf32> to vector<128xf32>
    %72 = vector.shape_cast %71 : vector<128xf32> to vector<1x128xf32>
    %cst_27 = arith.constant 1.250000e-01 : f32
    %73 = vector.broadcast %cst_27 : f32 to vector<1x128xf32>
    %74 = arith.mulf %72, %73 : vector<1x128xf32>
    %cst_28 = arith.constant 9.99999974E-6 : f32
    %75 = vector.broadcast %cst_28 : f32 to vector<1x128xf32>
    %76 = arith.addf %74, %75 : vector<1x128xf32>
    %77 = math.rsqrt %76 : vector<1x128xf32>
    %78 = arith.mulf %62, %77 : vector<1x128xf32>
    %79 = arith.mulf %67, %78 : vector<1x128xf32>
    %80 = arith.subf %63, %79 : vector<1x128xf32>
    %81 = vector.broadcast %78 : vector<1x128xf32> to vector<8x128xf32>
    %82 = arith.mulf %61, %81 : vector<8x128xf32>
    %83 = vector.broadcast %80 : vector<1x128xf32> to vector<8x128xf32>
    %84 = arith.addf %82, %83 : vector<8x128xf32>
    %c0_29 = arith.constant 0 : index
    %c0_30 = arith.constant 0 : index
    %85 = vector.load %arg3[%c0_29, %c0_30] : memref<8x128xf32, #tpu.memory_space<vmem>>, vector<8x128xf32>
    tpu.vector_store %arg3[%c0_29, %c0_30], %84 {strides = array<i32>} : memref<8x128xf32, #tpu.memory_space<vmem>>, vector<8x128xf32>,
    return
  }
}

</mosaic_0001>

<llo_original>
// kernel: tpu_custom_call.1
$region0: #{tpu_custom_call.1}
  #allocation0 [shape = 'u32[]', space=smem, size = 0x4, offset = 0x4, fixed_abs, tag = 'smem constant byte address 0x4 - core index']
  #allocation1 [shape = 'u32[144,128]{1,0:T(1,128)}', space=vmem, size = 0x12000, scoped, tag = 'internal scratch']
  %s0 = inlined_call_operand.hbm [shape: f32[8,128], index: 0, kind: input, shape index: {}]
  %s1 = inlined_call_operand.hbm [shape: bf16[3,128,128], index: 1, kind: input, shape index: {}]
  %s2 = inlined_call_operand.vmem [shape: f32[2,384], index: 2, kind: input, shape index: {}]
  %s3 = inlined_call_operand.hbm [shape: f32[8,128], index: 3, kind: output, shape index: {}]
  %s4 = sld [smem:[#allocation0]]
  $region30: #{tpu_custom_call.1} parent=0
    _
  %s6 = ssub.s32 1, %s4
  %s7 = scalar_select 0, %s6, %s4
  $region1: #{tpu_custom_call.1} parent=0
    #allocation2 [shape = 'u8[4096]{0}', space=vmem, size = 0x1000, scoped, tag = 'input window, operand 0, single buffered']
    #allocation3 [shape = 's32[1]{0}', space=sflag, size = 0x4, scoped, tag = 'scoped memory for tpu_custom_call.1']
    #allocation4 [shape = 's32[1]{0}', space=sflag, size = 0x4, scoped, tag = 'scoped memory for tpu_custom_call.1']
    #allocation5 [shape = 'u8[98304]{0}', space=vmem, size = 0x18000, scoped, tag = 'input window, operand 1, single buffered']
    #allocation6 [shape = 's32[1]{0}', space=sflag, size = 0x4, scoped, tag = 'scoped memory for tpu_custom_call.1']
    #allocation7 [shape = 'u8[4096]{0}', space=vmem, size = 0x1000, scoped, tag = 'output window, operand 0, single buffered']
    %8 = vsyncpa [#allocation3], 0
    %9 = vsyncpa [#allocation6], 0
    %10 = vsyncpa [#allocation4], 0
    // Predicated region
    $region2: #{tpu_custom_call.1} parent=1 // pred_check
      _
    $region3: #{tpu_custom_call.1} parent=1 // pred_check_branch
      %12 = sbr.rel (0) target = $region5
    $region4: #{tpu_custom_call.1} parent=1 // pred_region
      %s14 = ssub.s32 128, 128
      %15 = vsyncadd [#allocation3], %s14
      %s17 = sshll.u32 [#allocation2], 4
      %s18 = int_to_ptr.vmem [resolvable:$true] %s17
      %20 = dma.hbm_to_vmem [thread:$0]  %s0, 128, %s18, [#allocation3]
    $region5: #{tpu_custom_call.1} parent=1 // pred_fallthru
      _
    // Predicated region
    $region6: #{tpu_custom_call.1} parent=1 // pred_check
      _
    $region7: #{tpu_custom_call.1} parent=1 // pred_check_branch
      %22 = sbr.rel (0) target = $region9
    $region8: #{tpu_custom_call.1} parent=1 // pred_region
      %s24 = ssub.s32 3072, 3072
      %25 = vsyncadd [#allocation6], %s24
      %s26 = sshll.u32 [#allocation5], 4
      %s27 = int_to_ptr.vmem [resolvable:$true] %s26
      %32 = dma.hbm_to_vmem [thread:$0]  %s1, 3072, %s27, [#allocation6], 64, 64, 4
    $region9: #{tpu_custom_call.1} parent=1 // pred_fallthru
      _
    // Predicated region
    $region10: #{tpu_custom_call.1} parent=1 // pred_check
      _
    $region11: #{tpu_custom_call.1} parent=1 // pred_check_branch
      %34 = sbr.rel (0) target = $region13
    $region12: #{tpu_custom_call.1} parent=1 // pred_region
      _
    $region13: #{tpu_custom_call.1} parent=1 // pred_fallthru
      _
    // Predicated region
    $region14: #{tpu_custom_call.1} parent=1 // pred_check
      _
    $region15: #{tpu_custom_call.1} parent=1 // pred_check_branch
      %36 = sbr.rel (0) target = $region17
    $region16: #{tpu_custom_call.1} parent=1 // pred_region
      %37 = dma.done [#allocation3], 128
    $region17: #{tpu_custom_call.1} parent=1 // pred_fallthru
      _
    // Predicated region
    $region18: #{tpu_custom_call.1} parent=1 // pred_check
      _
    $region19: #{tpu_custom_call.1} parent=1 // pred_check_branch
      %39 = sbr.rel (0) target = $region21
    $region20: #{tpu_custom_call.1} parent=1 // pred_region
      %40 = dma.done [#allocation6], 3072
    $region21: #{tpu_custom_call.1} parent=1 // pred_fallthru
      _
    %v42 = vld [vmem:[#allocation2] sm:$0xff]
    %v43 = vld [vmem:[#allocation5] sm:$0xf]
    %v44 = vld [vmem:[#allocation5 + $0x4] sm:$0xf]
    %v45 = vld [vmem:[#allocation5 + $0x8] sm:$0xf]
    %v46 = vld [vmem:[#allocation5 + $0xc] sm:$0xf]
    %v47 = vld [vmem:[#allocation5 + $0x10] sm:$0xf]
    %v48 = vld [vmem:[#allocation5 + $0x14] sm:$0xf]
    %v49 = vld [vmem:[#allocation5 + $0x18] sm:$0xf]
    %v50 = vld [vmem:[#allocation5 + $0x1c] sm:$0xf]
    %v51 = vld [vmem:[#allocation5 + $0x20] sm:$0xf]
    %v52 = vld [vmem:[#allocation5 + $0x24] sm:$0xf]
    %v53 = vld [vmem:[#allocation5 + $0x28] sm:$0xf]
    %v54 = vld [vmem:[#allocation5 + $0x2c] sm:$0xf]
    %v55 = vld [vmem:[#allocation5 + $0x30] sm:$0xf]
    %v56 = vld [vmem:[#allocation5 + $0x34] sm:$0xf]
    %v57 = vld [vmem:[#allocation5 + $0x38] sm:$0xf]
    %v58 = vld [vmem:[#allocation5 + $0x3c] sm:$0xf]
    %v59 = vld [vmem:[%s2] sm:$0x3]
    %v60 = vpack.c.bf16 %v42, %v42
    %v77 = vunpack.c.l.b16 %v43
    %v78 = vunpack.c.l.b16 %v44
    %v79 = vunpack.c.l.b16 %v45
    %v80 = vunpack.c.l.b16 %v46
    %v81 = vunpack.c.l.b16 %v47
    %v82 = vunpack.c.l.b16 %v48
    %v83 = vunpack.c.l.b16 %v49
    %v84 = vunpack.c.l.b16 %v50
    %v85 = vunpack.c.l.b16 %v51
    %v86 = vunpack.c.l.b16 %v52
    %v87 = vunpack.c.l.b16 %v53
    %v88 = vunpack.c.l.b16 %v54
    %v89 = vunpack.c.l.b16 %v55
    %v90 = vunpack.c.l.b16 %v56
    %v91 = vunpack.c.l.b16 %v57
    %v92 = vunpack.c.l.b16 %v58
    %v93 = vpack.c.b16 %v78, %v77
    %v94 = vpack.c.b16 %v80, %v79
    %v95 = vpack.c.b16 %v82, %v81
    %v96 = vpack.c.b16 %v84, %v83
    %v97 = vpack.c.b16 %v86, %v85
    %v98 = vpack.c.b16 %v88, %v87
    %v99 = vpack.c.b16 %v90, %v89
    %v100 = vpack.c.b16 %v92, %v91
    %109 = vmatprep.subr.bf16.mxu0 0
    %110 = vmatpush1.bf16.msra.mxu0 %v93
    %111 = vmatprep.subr.bf16.mxu0 0
    %112 = vmatpush1.bf16.msra.mxu0 %v94
    %113 = vmatprep.subr.bf16.mxu0 0
    %114 = vmatpush1.bf16.msra.mxu0 %v95
    %115 = vmatprep.subr.bf16.mxu0 0
    %116 = vmatpush1.bf16.msra.mxu0 %v96
    %117 = vmatprep.subr.bf16.mxu0 0
    %118 = vmatpush1.bf16.msra.mxu0 %v97
    %119 = vmatprep.subr.bf16.mxu0 0
    %120 = vmatpush1.bf16.msra.mxu0 %v98
    %121 = vmatprep.subr.bf16.mxu0 0
    %122 = vmatpush1.bf16.msra.mxu0 %v99
    %123 = vmatprep.subr.bf16.mxu0 0
    %124 = vmatpush1.bf16.msra.mxu0 %v100
    %125 = vmatprep.subr.bf16.mxu0 0
    %126 = vmatpush1.bf16.msra.mxu0 0
    %127 = vmatprep.subr.bf16.mxu0 0
    %128 = vmatpush1.bf16.msra.mxu0 0
    %129 = vmatprep.subr.bf16.mxu0 0
    %130 = vmatpush1.bf16.msra.mxu0 0
    %131 = vmatprep.subr.bf16.mxu0 0
    %132 = vmatpush1.bf16.msra.mxu0 0
    %133 = vmatprep.subr.bf16.mxu0 0
    %134 = vmatpush1.bf16.msra.mxu0 0
    %135 = vmatprep.subr.bf16.mxu0 0
    %136 = vmatpush1.bf16.msra.mxu0 0
    %137 = vmatprep.subr.bf16.mxu0 0
    %138 = vmatpush1.bf16.msra.mxu0 0
    %139 = vmatprep.subr.bf16.mxu0 0
    %140 = vmatpush1.bf16.msra.mxu0 0
    %141 = vmatprep.mubr.bf16.mxu0 0
    %142 = vmatmul.mubr.bf16.gmra.mrb[0].mxu0 %v60
    %v143 = vpop.f32.mrb[0].mxu0
    %v144 = vadd.f32 0.0, %v143
    %v145 = vpop.f32.mrb[0].mxu0
    %v146 = vpop.f32.mrb[0].mxu0
    %v147 = vpop.f32.mrb[0].mxu0
    %148 = vdwg.mxu0
    %v149 = vrot.slane %v144, 4
    %v150 = vadd.f32 %v144, %v149
    %v151 = vrot.slane %v150, 2
    %v152 = vadd.f32 %v150, %v151
    %v153 = vrot.slane %v152, 1
    %v154 = vadd.f32 %v152, %v153
    %v155 = vmul.f32 %v154, 0.125
    %v156 = vsub.f32 %v144, %v155
    %v157 = vmul.f32 %v156, %v156
    %v158 = vrot.slane %v157, 4
    %v159 = vadd.f32 %v157, %v158
    %v160 = vrot.slane %v159, 2
    %v161 = vadd.f32 %v159, %v160
    %v162 = vrot.slane %v161, 1
    %v163 = vadd.f32 %v161, %v162
    %v164 = vmul.f32 %v163, 0.125
    %v165 = vadd.f32 %v164, 1e-05
    %v166 = vrsqrt.pop %v165
    %v167 = vmul.f32 %v59, %v166
    %v168 = vmul.f32 %v155, %v167
    %v171 = vunpack.c.l.s4 1983009808
    %v172 = vunpack.c.0.s8 %v171
    %v173 = vlaneseq
    %v174 = vshrl.u32 %v173, 7
    %v175 = vsub.s32 %v172, %v174
    %v176 = vrot.slane %v168, %v175
    %v177 = vrot.slane %v176, 7
    %v179 = vsub.f32 %v59, %v177
    %v180 = vlaneseq
    %v181 = vshrl.u32 %v180, 7
    %v182 = vsub.s32 0, %v181
    %v183 = vrot.slane %v167, %v182
    %v184 = vmul.f32 %v144, %v183
    %v185 = vlaneseq
    %v186 = vshrl.u32 %v185, 7
    %v187 = vsub.s32 1, %v186
    %v188 = vrot.slane %v179, %v187
    %v189 = vadd.f32 %v184, %v188
    %s190 = scalar_lea.vmem [#allocation5], 64
    %v191 = vld [vmem:[%s190] sm:$0xf]
    %v192 = vld [vmem:[%s190 + $0x4] sm:$0xf]
    %v193 = vld [vmem:[%s190 + $0x8] sm:$0xf]
    %v194 = vld [vmem:[%s190 + $0xc] sm:$0xf]
    %v195 = vld [vmem:[%s190 + $0x10] sm:$0xf]
    %v196 = vld [vmem:[%s190 + $0x14] sm:$0xf]
    %v197 = vld [vmem:[%s190 + $0x18] sm:$0xf]
    %v198 = vld [vmem:[%s190 + $0x1c] sm:$0xf]
    %v199 = vld [vmem:[%s190 + $0x20] sm:$0xf]
    %v200 = vld [vmem:[%s190 + $0x24] sm:$0xf]
    %v201 = vld [vmem:[%s190 + $0x28] sm:$0xf]
    %v202 = vld [vmem:[%s190 + $0x2c] sm:$0xf]
    %v203 = vld [vmem:[%s190 + $0x30] sm:$0xf]
    %v204 = vld [vmem:[%s190 + $0x34] sm:$0xf]
    %v205 = vld [vmem:[%s190 + $0x38] sm:$0xf]
    %v206 = vld [vmem:[%s190 + $0x3c] sm:$0xf]
    %v207 = vld [vmem:[%s2 + $0x2] sm:$0x3]
    %v208 = vpack.c.bf16 %v189, %v189
    %v225 = vunpack.c.l.b16 %v191
    %v226 = vunpack.c.l.b16 %v192
    %v227 = vunpack.c.l.b16 %v193
    %v228 = vunpack.c.l.b16 %v194
    %v229 = vunpack.c.l.b16 %v195
    %v230 = vunpack.c.l.b16 %v196
    %v231 = vunpack.c.l.b16 %v197
    %v232 = vunpack.c.l.b16 %v198
    %v233 = vunpack.c.l.b16 %v199
    %v234 = vunpack.c.l.b16 %v200
    %v235 = vunpack.c.l.b16 %v201
    %v236 = vunpack.c.l.b16 %v202
    %v237 = vunpack.c.l.b16 %v203
    %v238 = vunpack.c.l.b16 %v204
    %v239 = vunpack.c.l.b16 %v205
    %v240 = vunpack.c.l.b16 %v206
    %v241 = vpack.c.b16 %v226, %v225
    %v242 = vpack.c.b16 %v228, %v227
    %v243 = vpack.c.b16 %v230, %v229
    %v244 = vpack.c.b16 %v232, %v231
    %v245 = vpack.c.b16 %v234, %v233
    %v246 = vpack.c.b16 %v236, %v235
    %v247 = vpack.c.b16 %v238, %v237
    %v248 = vpack.c.b16 %v240, %v239
    %257 = vmatprep.subr.bf16.mxu0 0
    %258 = vmatpush1.bf16.msra.mxu0 %v241
    %259 = vmatprep.subr.bf16.mxu0 0
    %260 = vmatpush1.bf16.msra.mxu0 %v242
    %261 = vmatprep.subr.bf16.mxu0 0
    %262 = vmatpush1.bf16.msra.mxu0 %v243
    %263 = vmatprep.subr.bf16.mxu0 0
    %264 = vmatpush1.bf16.msra.mxu0 %v244
    %265 = vmatprep.subr.bf16.mxu0 0
    %266 = vmatpush1.bf16.msra.mxu0 %v245
    %267 = vmatprep.subr.bf16.mxu0 0
    %268 = vmatpush1.bf16.msra.mxu0 %v246
    %269 = vmatprep.subr.bf16.mxu0 0
    %270 = vmatpush1.bf16.msra.mxu0 %v247
    %271 = vmatprep.subr.bf16.mxu0 0
    %272 = vmatpush1.bf16.msra.mxu0 %v248
    %273 = vmatprep.subr.bf16.mxu0 0
    %274 = vmatpush1.bf16.msra.mxu0 0
    %275 = vmatprep.subr.bf16.mxu0 0
    %276 = vmatpush1.bf16.msra.mxu0 0
    %277 = vmatprep.subr.bf16.mxu0 0
    %278 = vmatpush1.bf16.msra.mxu0 0
    %279 = vmatprep.subr.bf16.mxu0 0
    %280 = vmatpush1.bf16.msra.mxu0 0
    %281 = vmatprep.subr.bf16.mxu0 0
    %282 = vmatpush1.bf16.msra.mxu0 0
    %283 = vmatprep.subr.bf16.mxu0 0
    %284 = vmatpush1.bf16.msra.mxu0 0
    %285 = vmatprep.subr.bf16.mxu0 0
    %286 = vmatpush1.bf16.msra.mxu0 0
    %287 = vmatprep.subr.bf16.mxu0 0
    %288 = vmatpush1.bf16.msra.mxu0 0
    %289 = vmatprep.mubr.bf16.mxu0 0
    %290 = vmatmul.mubr.bf16.gmra.mrb[0].mxu0 %v208
    %v291 = vpop.f32.mrb[0].mxu0
    %v292 = vadd.f32 0.0, %v291
    %v293 = vpop.f32.mrb[0].mxu0
    %v294 = vpop.f32.mrb[0].mxu0
    %v295 = vpop.f32.mrb[0].mxu0
    %296 = vdwg.mxu0
    %v297 = vrot.slane %v292, 4
    %v298 = vadd.f32 %v292, %v297
    %v299 = vrot.slane %v298, 2
    %v300 = vadd.f32 %v298, %v299
    %v301 = vrot.slane %v300, 1
    %v302 = vadd.f32 %v300, %v301
    %v303 = vmul.f32 %v302, 0.125
    %v304 = vsub.f32 %v292, %v303
    %v305 = vmul.f32 %v304, %v304
    %v306 = vrot.slane %v305, 4
    %v307 = vadd.f32 %v305, %v306
    %v308 = vrot.slane %v307, 2
    %v309 = vadd.f32 %v307, %v308
    %v310 = vrot.slane %v309, 1
    %v311 = vadd.f32 %v309, %v310
    %v312 = vmul.f32 %v311, 0.125
    %v313 = vadd.f32 %v312, 1e-05
    %v314 = vrsqrt.pop %v313
    %v315 = vmul.f32 %v207, %v314
    %v316 = vmul.f32 %v303, %v315
    %v319 = vunpack.c.l.s4 1983009808
    %v320 = vunpack.c.0.s8 %v319
    %v321 = vlaneseq
    %v322 = vshrl.u32 %v321, 7
    %v323 = vsub.s32 %v320, %v322
    %v324 = vrot.slane %v316, %v323
    %v325 = vrot.slane %v324, 7
    %v327 = vsub.f32 %v207, %v325
    %v328 = vlaneseq
    %v329 = vshrl.u32 %v328, 7
    %v330 = vsub.s32 0, %v329
    %v331 = vrot.slane %v315, %v330
    %v332 = vmul.f32 %v292, %v331
    %v333 = vlaneseq
    %v334 = vshrl.u32 %v333, 7
    %v335 = vsub.s32 1, %v334
    %v336 = vrot.slane %v327, %v335
    %v337 = vadd.f32 %v332, %v336
    %s338 = scalar_lea.vmem [#allocation5], 128
    %v339 = vld [vmem:[%s338] sm:$0xf]
    %v340 = vld [vmem:[%s338 + $0x4] sm:$0xf]
    %v341 = vld [vmem:[%s338 + $0x8] sm:$0xf]
    %v342 = vld [vmem:[%s338 + $0xc] sm:$0xf]
    %v343 = vld [vmem:[%s338 + $0x10] sm:$0xf]
    %v344 = vld [vmem:[%s338 + $0x14] sm:$0xf]
    %v345 = vld [vmem:[%s338 + $0x18] sm:$0xf]
    %v346 = vld [vmem:[%s338 + $0x1c] sm:$0xf]
    %v347 = vld [vmem:[%s338 + $0x20] sm:$0xf]
    %v348 = vld [vmem:[%s338 + $0x24] sm:$0xf]
    %v349 = vld [vmem:[%s338 + $0x28] sm:$0xf]
    %v350 = vld [vmem:[%s338 + $0x2c] sm:$0xf]
    %v351 = vld [vmem:[%s338 + $0x30] sm:$0xf]
    %v352 = vld [vmem:[%s338 + $0x34] sm:$0xf]
    %v353 = vld [vmem:[%s338 + $0x38] sm:$0xf]
    %v354 = vld [vmem:[%s338 + $0x3c] sm:$0xf]
    %v355 = vld [vmem:[%s2 + $0x4] sm:$0x3]
    %v356 = vpack.c.bf16 %v337, %v337
    %v373 = vunpack.c.l.b16 %v339
    %v374 = vunpack.c.l.b16 %v340
    %v375 = vunpack.c.l.b16 %v341
    %v376 = vunpack.c.l.b16 %v342
    %v377 = vunpack.c.l.b16 %v343
    %v378 = vunpack.c.l.b16 %v344
    %v379 = vunpack.c.l.b16 %v345
    %v380 = vunpack.c.l.b16 %v346
    %v381 = vunpack.c.l.b16 %v347
    %v382 = vunpack.c.l.b16 %v348
    %v383 = vunpack.c.l.b16 %v349
    %v384 = vunpack.c.l.b16 %v350
    %v385 = vunpack.c.l.b16 %v351
    %v386 = vunpack.c.l.b16 %v352
    %v387 = vunpack.c.l.b16 %v353
    %v388 = vunpack.c.l.b16 %v354
    %v389 = vpack.c.b16 %v374, %v373
    %v390 = vpack.c.b16 %v376, %v375
    %v391 = vpack.c.b16 %v378, %v377
    %v392 = vpack.c.b16 %v380, %v379
    %v393 = vpack.c.b16 %v382, %v381
    %v394 = vpack.c.b16 %v384, %v383
    %v395 = vpack.c.b16 %v386, %v385
    %v396 = vpack.c.b16 %v388, %v387
    %405 = vmatprep.subr.bf16.mxu0 0
    %406 = vmatpush1.bf16.msra.mxu0 %v389
    %407 = vmatprep.subr.bf16.mxu0 0
    %408 = vmatpush1.bf16.msra.mxu0 %v390
    %409 = vmatprep.subr.bf16.mxu0 0
    %410 = vmatpush1.bf16.msra.mxu0 %v391
    %411 = vmatprep.subr.bf16.mxu0 0
    %412 = vmatpush1.bf16.msra.mxu0 %v392
    %413 = vmatprep.subr.bf16.mxu0 0
    %414 = vmatpush1.bf16.msra.mxu0 %v393
    %415 = vmatprep.subr.bf16.mxu0 0
    %416 = vmatpush1.bf16.msra.mxu0 %v394
    %417 = vmatprep.subr.bf16.mxu0 0
    %418 = vmatpush1.bf16.msra.mxu0 %v395
    %419 = vmatprep.subr.bf16.mxu0 0
    %420 = vmatpush1.bf16.msra.mxu0 %v396
    %421 = vmatprep.subr.bf16.mxu0 0
    %422 = vmatpush1.bf16.msra.mxu0 0
    %423 = vmatprep.subr.bf16.mxu0 0
    %424 = vmatpush1.bf16.msra.mxu0 0
    %425 = vmatprep.subr.bf16.mxu0 0
    %426 = vmatpush1.bf16.msra.mxu0 0
    %427 = vmatprep.subr.bf16.mxu0 0
    %428 = vmatpush1.bf16.msra.mxu0 0
    %429 = vmatprep.subr.bf16.mxu0 0
    %430 = vmatpush1.bf16.msra.mxu0 0
    %431 = vmatprep.subr.bf16.mxu0 0
    %432 = vmatpush1.bf16.msra.mxu0 0
    %433 = vmatprep.subr.bf16.mxu0 0
    %434 = vmatpush1.bf16.msra.mxu0 0
    %435 = vmatprep.subr.bf16.mxu0 0
    %436 = vmatpush1.bf16.msra.mxu0 0
    %437 = vmatprep.mubr.bf16.mxu0 0
    %438 = vmatmul.mubr.bf16.gmra.mrb[0].mxu0 %v356
    %v439 = vpop.f32.mrb[0].mxu0
    %v440 = vadd.f32 0.0, %v439
    %v441 = vpop.f32.mrb[0].mxu0
    %v442 = vpop.f32.mrb[0].mxu0
    %v443 = vpop.f32.mrb[0].mxu0
    %444 = vdwg.mxu0
    %v445 = vrot.slane %v440, 4
    %v446 = vadd.f32 %v440, %v445
    %v447 = vrot.slane %v446, 2
    %v448 = vadd.f32 %v446, %v447
    %v449 = vrot.slane %v448, 1
    %v450 = vadd.f32 %v448, %v449
    %v451 = vmul.f32 %v450, 0.125
    %v452 = vsub.f32 %v440, %v451
    %v453 = vmul.f32 %v452, %v452
    %v454 = vrot.slane %v453, 4
    %v455 = vadd.f32 %v453, %v454
    %v456 = vrot.slane %v455, 2
    %v457 = vadd.f32 %v455, %v456
    %v458 = vrot.slane %v457, 1
    %v459 = vadd.f32 %v457, %v458
    %v460 = vmul.f32 %v459, 0.125
    %v461 = vadd.f32 %v460, 1e-05
    %v462 = vrsqrt.pop %v461
    %v463 = vmul.f32 %v355, %v462
    %v464 = vmul.f32 %v451, %v463
    %v467 = vunpack.c.l.s4 1983009808
    %v468 = vunpack.c.0.s8 %v467
    %v469 = vlaneseq
    %v470 = vshrl.u32 %v469, 7
    %v471 = vsub.s32 %v468, %v470
    %v472 = vrot.slane %v464, %v471
    %v473 = vrot.slane %v472, 7
    %v475 = vsub.f32 %v355, %v473
    %v476 = vlaneseq
    %v477 = vshrl.u32 %v476, 7
    %v478 = vsub.s32 0, %v477
    %v479 = vrot.slane %v463, %v478
    %v480 = vmul.f32 %v440, %v479
    %v481 = vlaneseq
    %v482 = vshrl.u32 %v481, 7
    %v483 = vsub.s32 1, %v482
    %v484 = vrot.slane %v475, %v483
    %v485 = vadd.f32 %v480, %v484
    %486 = vst [vmem:[#allocation7] sm:$0xff] %v485
    // Predicated region
    $region22: #{tpu_custom_call.1} parent=1 // pred_check
      _
    $region23: #{tpu_custom_call.1} parent=1 // pred_check_branch
      %488 = sbr.rel (0) target = $region25
    $region24: #{tpu_custom_call.1} parent=1 // pred_region
      %s490 = ssub.s32 128, 128
      %491 = vsyncadd [#allocation4], %s490
      %s493 = sshll.u32 [#allocation7], 4
      %s494 = int_to_ptr.vmem [resolvable:$true] %s493
      %496 = dma.vmem_to_hbm [thread:$0]  %s494, 128, %s3, [#allocation4]
    $region25: #{tpu_custom_call.1} parent=1 // pred_fallthru
      _
    // Predicated region
    $region26: #{tpu_custom_call.1} parent=1 // pred_check
      _
    $region27: #{tpu_custom_call.1} parent=1 // pred_check_branch
      %498 = sbr.rel (0) target = $region29
    $region28: #{tpu_custom_call.1} parent=1 // pred_region
      %499 = dma.done [#allocation4], 128
    $region29: #{tpu_custom_call.1} parent=1 // pred_fallthru
      _
    %500 = vsyncpa [#allocation3], 1
    %501 = vsyncpa [#allocation6], 1
    %502 = vsyncpa [#allocation4], 1

</llo_original>
